<compile_context>
chip_gen: v7x
topology: tpu7x:2x2x1
jax: 0.10.0
libtpu: 0.0.40
codegen_flags: <defaults>
</compile_context>

<pallas_src>
import functools
import math

import jax
import jax.numpy as jnp
from jax.experimental import pallas as pl
from jax.experimental.pallas import tpu as pltpu


def _round_up(v, m):
    return (v + m - 1) // m * m


def _vmem_capacity_bytes():
    try:
        return int(pltpu.get_tpu_info().vmem_capacity_bytes)
    except Exception:
        return 64 * 1024 * 1024  # conservative default (v7x-sized VMEM)


def _arcface_kernel(x_ref, w_ref, label_ref, margin_ref,
                    logits_ref, loss_ref,
                    cosm_s, sinm_s, mm_s, m_s, l_s, tgt_s,
                    *, s, easy_margin, num_classes):
    c = pl.program_id(1)
    last = pl.num_programs(1) - 1
    tb, tc = logits_ref.shape

    # ---- B-tile-invariant work: once per batch tile, on the first class tile
    @pl.when(c == 0)
    def _init():
        mg = margin_ref[...]                       # (tb, 1) f32
        cm = jnp.cos(mg)
        sm = jnp.sin(mg)
        cosm_s[...] = cm
        sinm_s[...] = sm
        mm_s[...] = sm * mg                        # sin(pi - m) * m == sin(m) * m
        m_s[...] = jnp.full_like(m_s, -1e30)
        l_s[...] = jnp.zeros_like(l_s)
        tgt_s[...] = jnp.zeros_like(tgt_s)

    # ---- cosine = xn @ wn   (pre-normalized bf16 operands, f32 MXU acc) ----
    cosine = jnp.dot(x_ref[...], w_ref[...],
                     preferred_element_type=jnp.float32)   # (tb, tc) f32

    label = label_ref[...]                                  # (tb, 1) i32
    col = jax.lax.broadcasted_iota(jnp.int32, (tb, tc), 1) + c * tc
    is_target = col == label                                # (tb, tc) bool

    # ---- phi only for the per-row target entry (a (tb,1) vector) ----------
    cos_t = jnp.sum(jnp.where(is_target, cosine, 0.0), axis=1, keepdims=True)
    sine_t = jnp.sqrt(1.0 - cos_t * cos_t + 1e-5)           # matches torch formula
    cm = cosm_s[...]
    sm = sinm_s[...]
    phi_t = cos_t * cm - sine_t * sm
    if easy_margin:
        phi_t = jnp.where(cos_t > 0.0, phi_t, cos_t)
    else:
        # th = cos(pi - m) = -cos(m);  mm = sin(pi - m) * m = sin(m) * m
        phi_t = jnp.where(cos_t > -cm, phi_t, cos_t - mm_s[...])

    logits = jnp.where(is_target, phi_t, cosine) * s
    logits_ref[...] = logits

    # target logit accumulation: only if the target column lives in this tile
    in_tile = jnp.logical_and(label >= c * tc, label < (c + 1) * tc)
    tgt_s[...] += jnp.where(in_tile, phi_t * s, 0.0)

    # ---- online logsumexp (padded-class mask only on the last class tile) --
    def accumulate(lse_logits):
        tile_max = jnp.max(lse_logits, axis=1, keepdims=True)
        m_new = jnp.maximum(m_s[...], tile_max)
        alpha = jnp.exp(m_s[...] - m_new)
        l_s[...] = alpha * l_s[...] + jnp.sum(jnp.exp(lse_logits - m_new),
                                              axis=1, keepdims=True)
        m_s[...] = m_new

    if num_classes % tc != 0:
        @pl.when(c != last)
        def _fast():
            accumulate(logits)

        @pl.when(c == last)
        def _masked():
            accumulate(jnp.where(col < num_classes, logits, -1e30))
    else:
        accumulate(logits)

    @pl.when(c == last)
    def _finalize():
        # per-sample CE:  logsumexp(logits) - logits[label]
        loss_ref[...] = m_s[...] + jnp.log(l_s[...]) - tgt_s[...]


def arcface_forward(x, weight, label, margin, *, s=30.0, easy_margin=False,
                    block_b=None, block_c=None):
    """x: (B, D), weight: (C, D) (nn.Linear layout), label: (B,), margin: (B,).

    Returns (logits (B, C) f32, scalar mean cross-entropy loss).
    """
    B, D = x.shape
    C, D2 = weight.shape
    assert D == D2

    vmem_cap = _vmem_capacity_bytes()
    big_vmem = vmem_cap >= 100 * 1024 * 1024          # v5e / v6e (128 MiB)

    # ---- tile sizes ---------------------------------------------------------
    if block_b is None:
        cap_b = 256 if (big_vmem and B >= 256) else 128
        block_b = min(_round_up(B, 16), cap_b)
        # v7x (2 TCs, small VMEM): if B fits one tile, split so both cores work.
        if (not big_vmem) and B > 16 and _round_up(B, block_b) == block_b:
            block_b = max(16, _round_up((B + 1) // 2, 16))
    block_b = max(8, _round_up(block_b, 8))
    B_pad = _round_up(B, block_b)

    if block_c is None:
        # Double-buffered bf16 weight (D, TC) + f32 logits (TB, TC) + bf16 x.
        budget = vmem_cap // 2
        stream = max(budget - 2 * block_b * D * 2 - (1 << 20), 2 << 20)
        cap = max(128, stream // (2 * (2 * D + 4 * block_b)))
        block_c = max(128, min(4096, (cap // 128) * 128, _round_up(C, 128)))
    block_c = _round_up(block_c, 128)
    C_pad = _round_up(C, block_c)

    # ---- wrapper-side preprocessing: normalize once, bf16, K-major weight ---
    x32 = x.astype(jnp.float32)
    xn = x32 * jax.lax.rsqrt(
        jnp.maximum(jnp.sum(x32 * x32, axis=1, keepdims=True), 1e-24))
    xp = jnp.pad(xn.astype(jnp.bfloat16), ((0, B_pad - B), (0, 0)))

    w32 = weight.astype(jnp.float32)
    wn = w32 * jax.lax.rsqrt(
        jnp.maximum(jnp.sum(w32 * w32, axis=1, keepdims=True), 1e-24))
    wt = jnp.pad(wn.astype(jnp.bfloat16).T, ((0, 0), (0, C_pad - C)))  # (D, C_pad)

    lp = jnp.pad(label.astype(jnp.int32), (0, B_pad - B)).reshape(B_pad, 1)
    mp = jnp.pad(margin.astype(jnp.float32), (0, B_pad - B)).reshape(B_pad, 1)

    # ---- per-generation VMEM limit (headroom, below physical) ---------------
    vmem_bytes = (2 * D * block_c * 2             # weight tiles (bf16, 2-buf)
                  + 2 * block_b * block_c * 4     # logits tiles (f32, 2-buf)
                  + 2 * block_b * D * 2           # x tiles (bf16, 2-buf)
                  + 16 * block_b * 512)           # narrow in/out + scratch (padded)
    vmem_limit = int(min(max(int(vmem_bytes * 1.4), 32 * 1024 * 1024),
                         (vmem_cap * 3) // 4))

    kernel = functools.partial(_arcface_kernel, s=float(s),
                               easy_margin=bool(easy_margin), num_classes=C)

    logits_pad, per_sample = pl.pallas_call(
        kernel,
        out_shape=(
            jax.ShapeDtypeStruct((B_pad, C_pad), jnp.float32),
            jax.ShapeDtypeStruct((B_pad, 1), jnp.float32),
        ),
        grid_spec=pltpu.PrefetchScalarGridSpec(
            num_scalar_prefetch=0,
            grid=(B_pad // block_b, C_pad // block_c),
            in_specs=[
                pl.BlockSpec((block_b, D), lambda b, c: (b, 0)),      # xn (bf16)
                pl.BlockSpec((D, block_c), lambda b, c: (0, c)),      # wn.T (bf16)
                pl.BlockSpec((block_b, 1), lambda b, c: (b, 0)),      # label
                pl.BlockSpec((block_b, 1), lambda b, c: (b, 0)),      # margin
            ],
            out_specs=(
                pl.BlockSpec((block_b, block_c), lambda b, c: (b, c)),  # logits
                pl.BlockSpec((block_b, 1), lambda b, c: (b, 0)),        # per-row CE
            ),
            scratch_shapes=[
                pltpu.VMEM((block_b, 1), jnp.float32),   # cos(margin)
                pltpu.VMEM((block_b, 1), jnp.float32),   # sin(margin)
                pltpu.VMEM((block_b, 1), jnp.float32),   # sin(margin)*margin
                pltpu.VMEM((block_b, 1), jnp.float32),   # running max
                pltpu.VMEM((block_b, 1), jnp.float32),   # running sum(exp)
                pltpu.VMEM((block_b, 1), jnp.float32),   # target logit
            ]),
        compiler_params=pltpu.CompilerParams(
            dimension_semantics=("parallel", "arbitrary"),
            vmem_limit_bytes=vmem_limit),
    )(xp, wt, lp, mp)

    logits = logits_pad[:B, :C]
    loss = jnp.mean(per_sample[:B, 0])
    return logits, loss


def xavier_uniform(key, out_features, in_features):
    # nn.init.xavier_uniform_ for a (out, in) 2-D weight.
    bound = math.sqrt(6.0 / (in_features + out_features))
    return jax.random.uniform(
        key, (out_features, in_features), jnp.float32, -bound, bound)


if __name__ == "__main__":
    B, in_features, out_features = 24, 64, 500
    key = jax.random.PRNGKey(0)
    k_x, k_w, k_l, k_m = jax.random.split(key, 4)

    x = jax.random.normal(k_x, (B, in_features), jnp.float32)
    weight = xavier_uniform(k_w, out_features, in_features)
    label = jax.random.randint(k_l, (B,), 0, out_features, jnp.int32)
    margin = jax.random.uniform(k_m, (B,), jnp.float32, 0.3, 0.6)

    # Small explicit tiles so the test exercises multiple B and C grid steps,
    # row padding (24 -> 32), class padding (500 -> 512), the masked last
    # class tile and the online logsumexp.
    logits, loss = arcface_forward(x, weight, label, margin,
                                   s=30.0, easy_margin=False,
                                   block_b=16, block_c=128)
    jax.block_until_ready((logits, loss))

    # ---- pure-JAX reference (mirrors the kernel's bf16 cosine matmul) ----
    xn = x * jax.lax.rsqrt(jnp.maximum(jnp.sum(x * x, 1, keepdims=True), 1e-24))
    wn = weight * jax.lax.rsqrt(
        jnp.maximum(jnp.sum(weight * weight, 1, keepdims=True), 1e-24))
    cosine = jnp.dot(xn.astype(jnp.bfloat16), wn.astype(jnp.bfloat16).T,
                     preferred_element_type=jnp.float32)
    sine = jnp.sqrt(1.0 - cosine ** 2 + 1e-5)
    mg = margin[:, None]
    cm, sm = jnp.cos(mg), jnp.sin(mg)
    phi = cosine * cm - sine * sm
    phi = jnp.where(cosine > -cm, phi, cosine - sm * mg)
    is_tgt = label[:, None] == jnp.arange(out_features)[None, :]
    ref_logits = jnp.where(is_tgt, phi, cosine) * 30.0
    ref_loss = jnp.mean(
        jax.nn.logsumexp(ref_logits, axis=1)
        - jnp.take_along_axis(ref_logits, label[:, None], axis=1)[:, 0])

    assert logits.shape == (B, out_features)
    assert jnp.allclose(logits, ref_logits, atol=2e-2, rtol=1e-3), (
        float(jnp.max(jnp.abs(logits - ref_logits))))
    assert jnp.allclose(loss, ref_loss, atol=2e-2, rtol=1e-3), (
        float(loss), float(ref_loss))
    print("KERNEL_OK")
</pallas_src>

<mosaic_0001>
module attributes {stable_mosaic.version = 11 : i64} {
  func.func @_arcface_kernel(%arg0: i32, %arg1: i32, %arg2: memref<16x64xbf16, #tpu.memory_space<vmem>>, %arg3: memref<64x128xbf16, #tpu.memory_space<vmem>>, %arg4: memref<16x1xi32, #tpu.memory_space<vmem>>, %arg5: memref<16x1xf32, #tpu.memory_space<vmem>>, %arg6: memref<16x128xf32, #tpu.memory_space<vmem>>, %arg7: memref<16x1xf32, #tpu.memory_space<vmem>>, %arg8: memref<16x1xf32, #tpu.memory_space<vmem>>, %arg9: memref<16x1xf32, #tpu.memory_space<vmem>>, %arg10: memref<16x1xf32, #tpu.memory_space<vmem>>, %arg11: memref<16x1xf32, #tpu.memory_space<vmem>>, %arg12: memref<16x1xf32, #tpu.memory_space<vmem>>, %arg13: memref<16x1xf32, #tpu.memory_space<vmem>>) attributes {dimension_semantics = [#tpu.dimension_semantics<parallel>, #tpu.dimension_semantics<arbitrary>], iteration_bounds = array<i64: 2, 4>, scalar_prefetch = 0 : i64, scratch_operands = 6 : i64, tpu.core_type = #tpu.core_type<tc>, window_params = [{transform_indices = @transform_0, window_bounds = array<i64: 16, 64>}, {transform_indices = @transform_1, window_bounds = array<i64: 64, 128>}, {transform_indices = @transform_2, window_bounds = array<i64: 16, 1>}, {transform_indices = @transform_3, window_bounds = array<i64: 16, 1>}, {transform_indices = @transform_4, window_bounds = array<i64: 16, 128>}, {transform_indices = @transform_5, window_bounds = array<i64: 16, 1>}]} {
    %c0_i32 = arith.constant 0 : i32
    %0 = arith.cmpi eq, %arg1, %c0_i32 : i32
    %1 = arith.extui %0 : i1 to i32
    %c0_i32_0 = arith.constant 0 : i32
    %2 = arith.cmpi ne, %1, %c0_i32_0 : i32
    scf.if %2 {
      %c0_33 = arith.constant 0 : index
      %c0_34 = arith.constant 0 : index
      %64 = vector.load %arg5[%c0_33, %c0_34] : memref<16x1xf32, #tpu.memory_space<vmem>>, vector<16x1xf32>
      %65 = math.cos %64 : vector<16x1xf32>
      %66 = math.sin %64 : vector<16x1xf32>
      %c0_35 = arith.constant 0 : index
      %c0_36 = arith.constant 0 : index
      %67 = vector.load %arg8[%c0_35, %c0_36] : memref<16x1xf32, #tpu.memory_space<vmem>>, vector<16x1xf32>
      tpu.vector_store %arg8[%c0_35, %c0_36], %65 {strides = array<i32>} : memref<16x1xf32, #tpu.memory_space<vmem>>, vector<16x1xf32>,
      %c0_37 = arith.constant 0 : index
      %c0_38 = arith.constant 0 : index
      %68 = vector.load %arg9[%c0_37, %c0_38] : memref<16x1xf32, #tpu.memory_space<vmem>>, vector<16x1xf32>
      tpu.vector_store %arg9[%c0_37, %c0_38], %66 {strides = array<i32>} : memref<16x1xf32, #tpu.memory_space<vmem>>, vector<16x1xf32>,
      %69 = arith.mulf %66, %64 : vector<16x1xf32>
      %c0_39 = arith.constant 0 : index
      %c0_40 = arith.constant 0 : index
      %70 = vector.load %arg10[%c0_39, %c0_40] : memref<16x1xf32, #tpu.memory_space<vmem>>, vector<16x1xf32>
      tpu.vector_store %arg10[%c0_39, %c0_40], %69 {strides = array<i32>} : memref<16x1xf32, #tpu.memory_space<vmem>>, vector<16x1xf32>,
      %cst_41 = arith.constant -1.000000e+30 : f32
      %71 = vector.broadcast %cst_41 : f32 to vector<16x1xf32>
      %c0_42 = arith.constant 0 : index
      %c0_43 = arith.constant 0 : index
      %72 = vector.load %arg11[%c0_42, %c0_43] : memref<16x1xf32, #tpu.memory_space<vmem>>, vector<16x1xf32>
      tpu.vector_store %arg11[%c0_42, %c0_43], %71 {strides = array<i32>} : memref<16x1xf32, #tpu.memory_space<vmem>>, vector<16x1xf32>,
      %cst_44 = arith.constant 0.000000e+00 : f32
      %73 = vector.broadcast %cst_44 : f32 to vector<16x1xf32>
      %c0_45 = arith.constant 0 : index
      %c0_46 = arith.constant 0 : index
      %74 = vector.load %arg12[%c0_45, %c0_46] : memref<16x1xf32, #tpu.memory_space<vmem>>, vector<16x1xf32>
      tpu.vector_store %arg12[%c0_45, %c0_46], %73 {strides = array<i32>} : memref<16x1xf32, #tpu.memory_space<vmem>>, vector<16x1xf32>,
      %cst_47 = arith.constant 0.000000e+00 : f32
      %75 = vector.broadcast %cst_47 : f32 to vector<16x1xf32>
      %c0_48 = arith.constant 0 : index
      %c0_49 = arith.constant 0 : index
      %76 = vector.load %arg13[%c0_48, %c0_49] : memref<16x1xf32, #tpu.memory_space<vmem>>, vector<16x1xf32>
      tpu.vector_store %arg13[%c0_48, %c0_49], %75 {strides = array<i32>} : memref<16x1xf32, #tpu.memory_space<vmem>>, vector<16x1xf32>,
    } else {
    }
    %c0 = arith.constant 0 : index
    %c0_1 = arith.constant 0 : index
    %3 = vector.load %arg2[%c0, %c0_1] : memref<16x64xbf16, #tpu.memory_space<vmem>>, vector<16x64xbf16>
    %c0_2 = arith.constant 0 : index
    %c0_3 = arith.constant 0 : index
    %4 = vector.load %arg3[%c0_2, %c0_3] : memref<64x128xbf16, #tpu.memory_space<vmem>>, vector<64x128xbf16>
    %cst = arith.constant dense<0.000000e+00> : vector<16x128xf32>
    %5 = tpu.matmul %3, %4, %cst {dimension_numbers = #tpu.dot_dimension_numbers<[1], [0], [0], [1], [0, 0, 1, 1], [], []>} : vector<16x64xbf16>, vector<64x128xbf16>, vector<16x128xf32> -> vector<16x128xf32>
    %c0_4 = arith.constant 0 : index
    %c0_5 = arith.constant 0 : index
    %6 = vector.load %arg4[%c0_4, %c0_5] : memref<16x1xi32, #tpu.memory_space<vmem>>, vector<16x1xi32>
    %7 = tpu.iota {dimensions = array<i32: 1>} : vector<16x128xi32>
    %c128_i32 = arith.constant 128 : i32
    %8 = arith.muli %arg1, %c128_i32 : i32
    %9 = vector.broadcast %8 : i32 to vector<16x128xi32>
    %10 = arith.addi %7, %9 : vector<16x128xi32>
    %11 = vector.broadcast %6 : vector<16x1xi32> to vector<16x128xi32>
    %12 = arith.cmpi eq, %10, %11 : vector<16x128xi32>
    %cst_6 = arith.constant 0.000000e+00 : f32
    %13 = vector.broadcast %cst_6 : f32 to vector<16x128xf32>
    %14 = arith.select %12, %5, %13 : vector<16x128xi1>, vector<16x128xf32>
    %cst_7 = arith.constant dense<0.000000e+00> : vector<16xf32>
    %15 = vector.multi_reduction <add>, %14, %cst_7 [1] : vector<16x128xf32> to vector<16xf32>
    %16 = vector.shape_cast %15 : vector<16xf32> to vector<16x1xf32>
    %17 = arith.mulf %16, %16 : vector<16x1xf32>
    %cst_8 = arith.constant 1.000000e+00 : f32
    %18 = vector.broadcast %cst_8 : f32 to vector<16x1xf32>
    %19 = arith.subf %18, %17 : vector<16x1xf32>
    %cst_9 = arith.constant 9.99999974E-6 : f32
    %20 = vector.broadcast %cst_9 : f32 to vector<16x1xf32>
    %21 = arith.addf %19, %20 : vector<16x1xf32>
    %22 = math.sqrt %21 : vector<16x1xf32>
    %c0_10 = arith.constant 0 : index
    %c0_11 = arith.constant 0 : index
    %23 = vector.load %arg8[%c0_10, %c0_11] : memref<16x1xf32, #tpu.memory_space<vmem>>, vector<16x1xf32>
    %c0_12 = arith.constant 0 : index
    %c0_13 = arith.constant 0 : index
    %24 = vector.load %arg9[%c0_12, %c0_13] : memref<16x1xf32, #tpu.memory_space<vmem>>, vector<16x1xf32>
    %25 = arith.mulf %16, %23 : vector<16x1xf32>
    %26 = arith.mulf %22, %24 : vector<16x1xf32>
    %27 = arith.subf %25, %26 : vector<16x1xf32>
    %cst_14 = arith.constant 0.000000e+00 : f32
    %28 = vector.broadcast %cst_14 : f32 to vector<16x1xf32>
    %29 = arith.subf %28, %23 : vector<16x1xf32>
    %30 = arith.cmpf ogt, %16, %29 : vector<16x1xf32>
    %c0_15 = arith.constant 0 : index
    %c0_16 = arith.constant 0 : index
    %31 = vector.load %arg10[%c0_15, %c0_16] : memref<16x1xf32, #tpu.memory_space<vmem>>, vector<16x1xf32>
    %32 = arith.subf %16, %31 : vector<16x1xf32>
    %33 = arith.select %30, %27, %32 : vector<16x1xi1>, vector<16x1xf32>
    %34 = vector.shape_cast %33 : vector<16x1xf32> to vector<16x1xf32>
    %35 = vector.broadcast %34 : vector<16x1xf32> to vector<16x128xf32>
    %36 = arith.select %12, %35, %5 : vector<16x128xi1>, vector<16x128xf32>
    %cst_17 = arith.constant 3.000000e+01 : f32
    %37 = vector.broadcast %cst_17 : f32 to vector<16x128xf32>
    %38 = arith.mulf %36, %37 : vector<16x128xf32>
    %c0_18 = arith.constant 0 : index
    %c0_19 = arith.constant 0 : index
    %39 = vector.load %arg6[%c0_18, %c0_19] : memref<16x128xf32, #tpu.memory_space<vmem>>, vector<16x128xf32>
    tpu.vector_store %arg6[%c0_18, %c0_19], %38 {strides = array<i32>} : memref<16x128xf32, #tpu.memory_space<vmem>>, vector<16x128xf32>,
    %c128_i32_20 = arith.constant 128 : i32
    %40 = arith.muli %arg1, %c128_i32_20 : i32
    %41 = vector.broadcast %40 : i32 to vector<16x1xi32>
    %42 = arith.cmpi sge, %6, %41 : vector<16x1xi32>
    %c1_i32 = arith.constant 1 : i32
    %43 = arith.addi %arg1, %c1_i32 : i32
    %c128_i32_21 = arith.constant 128 : i32
    %44 = arith.muli %43, %c128_i32_21 : i32
    %45 = vector.broadcast %44 : i32 to vector<16x1xi32>
    %46 = arith.cmpi slt, %6, %45 : vector<16x1xi32>
    %47 = arith.andi %42, %46 : vector<16x1xi1>
    %c0_22 = arith.constant 0 : index
    %c0_23 = arith.constant 0 : index
    %48 = vector.load %arg13[%c0_22, %c0_23] : memref<16x1xf32, #tpu.memory_space<vmem>>, vector<16x1xf32>
    %cst_24 = arith.constant 3.000000e+01 : f32
    %49 = vector.broadcast %cst_24 : f32 to vector<16x1xf32>
    %50 = arith.mulf %33, %49 : vector<16x1xf32>
    %cst_25 = arith.constant 0.000000e+00 : f32
    %51 = vector.broadcast %cst_25 : f32 to vector<16x1xf32>
    %52 = arith.select %47, %50, %51 : vector<16x1xi1>, vector<16x1xf32>
    %53 = arith.addf %48, %52 : vector<16x1xf32>
    %c0_26 = arith.constant 0 : index
    %c0_27 = arith.constant 0 : index
    %54 = vector.load %arg13[%c0_26, %c0_27] : memref<16x1xf32, #tpu.memory_space<vmem>>, vector<16x1xf32>
    tpu.vector_store %arg13[%c0_26, %c0_27], %53 {strides = array<i32>} : memref<16x1xf32, #tpu.memory_space<vmem>>, vector<16x1xf32>,
    %c3_i32 = arith.constant 3 : i32
    %55 = arith.cmpi ne, %arg1, %c3_i32 : i32
    %56 = arith.extui %55 : i1 to i32
    %c0_i32_28 = arith.constant 0 : i32
    %57 = arith.cmpi ne, %56, %c0_i32_28 : i32
    scf.if %57 {
      %cst_33 = arith.constant dense<0xFF800000> : vector<16xf32>
      %64 = vector.multi_reduction <maximumf>, %38, %cst_33 [1] : vector<16x128xf32> to vector<16xf32>
      %65 = vector.shape_cast %64 : vector<16xf32> to vector<16x1xf32>
      %c0_34 = arith.constant 0 : index
      %c0_35 = arith.constant 0 : index
      %66 = vector.load %arg11[%c0_34, %c0_35] : memref<16x1xf32, #tpu.memory_space<vmem>>, vector<16x1xf32>
      %67 = arith.maximumf %66, %65 : vector<16x1xf32>
      %c0_36 = arith.constant 0 : index
      %c0_37 = arith.constant 0 : index
      %68 = vector.load %arg11[%c0_36, %c0_37] : memref<16x1xf32, #tpu.memory_space<vmem>>, vector<16x1xf32>
      %69 = arith.subf %68, %67 : vector<16x1xf32>
      %70 = math.exp %69 : vector<16x1xf32>
      %c0_38 = arith.constant 0 : index
      %c0_39 = arith.constant 0 : index
      %71 = vector.load %arg12[%c0_38, %c0_39] : memref<16x1xf32, #tpu.memory_space<vmem>>, vector<16x1xf32>
      %72 = arith.mulf %70, %71 : vector<16x1xf32>
      %73 = vector.broadcast %67 : vector<16x1xf32> to vector<16x128xf32>
      %74 = arith.subf %38, %73 : vector<16x128xf32>
      %75 = math.exp %74 : vector<16x128xf32>
      %cst_40 = arith.constant dense<0.000000e+00> : vector<16xf32>
      %76 = vector.multi_reduction <add>, %75, %cst_40 [1] : vector<16x128xf32> to vector<16xf32>
      %77 = vector.shape_cast %76 : vector<16xf32> to vector<16x1xf32>
      %78 = arith.addf %72, %77 : vector<16x1xf32>
      %c0_41 = arith.constant 0 : index
      %c0_42 = arith.constant 0 : index
      %79 = vector.load %arg12[%c0_41, %c0_42] : memref<16x1xf32, #tpu.memory_space<vmem>>, vector<16x1xf32>
      tpu.vector_store %arg12[%c0_41, %c0_42], %78 {strides = array<i32>} : memref<16x1xf32, #tpu.memory_space<vmem>>, vector<16x1xf32>,
      %c0_43 = arith.constant 0 : index
      %c0_44 = arith.constant 0 : index
      %80 = vector.load %arg11[%c0_43, %c0_44] : memref<16x1xf32, #tpu.memory_space<vmem>>, vector<16x1xf32>
      tpu.vector_store %arg11[%c0_43, %c0_44], %67 {strides = array<i32>} : memref<16x1xf32, #tpu.memory_space<vmem>>, vector<16x1xf32>,
    } else {
    }
    %c3_i32_29 = arith.constant 3 : i32
    %58 = arith.cmpi eq, %arg1, %c3_i32_29 : i32
    %59 = arith.extui %58 : i1 to i32
    %c0_i32_30 = arith.constant 0 : i32
    %60 = arith.cmpi ne, %59, %c0_i32_30 : i32
    scf.if %60 {
      %c500_i32 = arith.constant 500 : i32
      %64 = vector.broadcast %c500_i32 : i32 to vector<16x128xi32>
      %65 = arith.cmpi slt, %10, %64 : vector<16x128xi32>
      %cst_33 = arith.constant -1.000000e+30 : f32
      %66 = vector.broadcast %cst_33 : f32 to vector<16x128xf32>
      %67 = arith.select %65, %38, %66 : vector<16x128xi1>, vector<16x128xf32>
      %cst_34 = arith.constant dense<0xFF800000> : vector<16xf32>
      %68 = vector.multi_reduction <maximumf>, %67, %cst_34 [1] : vector<16x128xf32> to vector<16xf32>
      %69 = vector.shape_cast %68 : vector<16xf32> to vector<16x1xf32>
      %c0_35 = arith.constant 0 : index
      %c0_36 = arith.constant 0 : index
      %70 = vector.load %arg11[%c0_35, %c0_36] : memref<16x1xf32, #tpu.memory_space<vmem>>, vector<16x1xf32>
      %71 = arith.maximumf %70, %69 : vector<16x1xf32>
      %c0_37 = arith.constant 0 : index
      %c0_38 = arith.constant 0 : index
      %72 = vector.load %arg11[%c0_37, %c0_38] : memref<16x1xf32, #tpu.memory_space<vmem>>, vector<16x1xf32>
      %73 = arith.subf %72, %71 : vector<16x1xf32>
      %74 = math.exp %73 : vector<16x1xf32>
      %c0_39 = arith.constant 0 : index
      %c0_40 = arith.constant 0 : index
      %75 = vector.load %arg12[%c0_39, %c0_40] : memref<16x1xf32, #tpu.memory_space<vmem>>, vector<16x1xf32>
      %76 = arith.mulf %74, %75 : vector<16x1xf32>
      %77 = vector.broadcast %71 : vector<16x1xf32> to vector<16x128xf32>
      %78 = arith.subf %67, %77 : vector<16x128xf32>
      %79 = math.exp %78 : vector<16x128xf32>
      %cst_41 = arith.constant dense<0.000000e+00> : vector<16xf32>
      %80 = vector.multi_reduction <add>, %79, %cst_41 [1] : vector<16x128xf32> to vector<16xf32>
      %81 = vector.shape_cast %80 : vector<16xf32> to vector<16x1xf32>
      %82 = arith.addf %76, %81 : vector<16x1xf32>
      %c0_42 = arith.constant 0 : index
      %c0_43 = arith.constant 0 : index
      %83 = vector.load %arg12[%c0_42, %c0_43] : memref<16x1xf32, #tpu.memory_space<vmem>>, vector<16x1xf32>
      tpu.vector_store %arg12[%c0_42, %c0_43], %82 {strides = array<i32>} : memref<16x1xf32, #tpu.memory_space<vmem>>, vector<16x1xf32>,
      %c0_44 = arith.constant 0 : index
      %c0_45 = arith.constant 0 : index
      %84 = vector.load %arg11[%c0_44, %c0_45] : memref<16x1xf32, #tpu.memory_space<vmem>>, vector<16x1xf32>
      tpu.vector_store %arg11[%c0_44, %c0_45], %71 {strides = array<i32>} : memref<16x1xf32, #tpu.memory_space<vmem>>, vector<16x1xf32>,
    } else {
    }
    %c3_i32_31 = arith.constant 3 : i32
    %61 = arith.cmpi eq, %arg1, %c3_i32_31 : i32
    %62 = arith.extui %61 : i1 to i32
    %c0_i32_32 = arith.constant 0 : i32
    %63 = arith.cmpi ne, %62, %c0_i32_32 : i32
    scf.if %63 {
      %c0_33 = arith.constant 0 : index
      %c0_34 = arith.constant 0 : index
      %64 = vector.load %arg11[%c0_33, %c0_34] : memref<16x1xf32, #tpu.memory_space<vmem>>, vector<16x1xf32>
      %c0_35 = arith.constant 0 : index
      %c0_36 = arith.constant 0 : index
      %65 = vector.load %arg12[%c0_35, %c0_36] : memref<16x1xf32, #tpu.memory_space<vmem>>, vector<16x1xf32>
      %66 = math.log %65 : vector<16x1xf32>
      %67 = arith.addf %64, %66 : vector<16x1xf32>
      %c0_37 = arith.constant 0 : index
      %c0_38 = arith.constant 0 : index
      %68 = vector.load %arg13[%c0_37, %c0_38] : memref<16x1xf32, #tpu.memory_space<vmem>>, vector<16x1xf32>
      %69 = arith.subf %67, %68 : vector<16x1xf32>
      %c0_39 = arith.constant 0 : index
      %c0_40 = arith.constant 0 : index
      %70 = vector.load %arg7[%c0_39, %c0_40] : memref<16x1xf32, #tpu.memory_space<vmem>>, vector<16x1xf32>
      tpu.vector_store %arg7[%c0_39, %c0_40], %69 {strides = array<i32>} : memref<16x1xf32, #tpu.memory_space<vmem>>, vector<16x1xf32>,
    } else {
    }
    return
  }
  func.func @transform_0(%arg0: i32, %arg1: i32) -> (i32, i32) {
    %c0_i32 = arith.constant 0 : i32
    %c0_i32_0 = arith.constant 0 : i32
    return %arg0, %c0_i32 : i32, i32
  }
  func.func @transform_1(%arg0: i32, %arg1: i32) -> (i32, i32) {
    %c0_i32 = arith.constant 0 : i32
    %c0_i32_0 = arith.constant 0 : i32
    return %c0_i32, %arg1 : i32, i32
  }
  func.func @transform_2(%arg0: i32, %arg1: i32) -> (i32, i32) {
    %c0_i32 = arith.constant 0 : i32
    %c0_i32_0 = arith.constant 0 : i32
    return %arg0, %c0_i32 : i32, i32
  }
  func.func @transform_3(%arg0: i32, %arg1: i32) -> (i32, i32) {
    %c0_i32 = arith.constant 0 : i32
    %c0_i32_0 = arith.constant 0 : i32
    return %arg0, %c0_i32 : i32, i32
  }
  func.func @transform_4(%arg0: i32, %arg1: i32) -> (i32, i32) {
    %c0_i32 = arith.constant 0 : i32
    return %arg0, %arg1 : i32, i32
  }
  func.func @transform_5(%arg0: i32, %arg1: i32) -> (i32, i32) {
    %c0_i32 = arith.constant 0 : i32
    %c0_i32_0 = arith.constant 0 : i32
    return %arg0, %c0_i32 : i32, i32
  }
}

</mosaic_0001>

<llo_original>
// kernel: tpu_custom_call.1
$region0: #{tpu_custom_call.1}
  #allocation0 [shape = 'u32[]', space=smem, size = 0x4, offset = 0x4, fixed_abs, tag = 'smem constant byte address 0x4 - core index']
  #allocation1 [shape = 'u32[144,128]{1,0:T(1,128)}', space=vmem, size = 0x12000, scoped, tag = 'internal scratch']
  #allocation2 [shape = 'f32[16,1]{1,0:T(8,128)}', space=vmem, size = 0x2000, scoped, tag = 'scratch operand']
  #allocation3 [shape = 'f32[16,1]{1,0:T(8,128)}', space=vmem, size = 0x2000, scoped, tag = 'scratch operand']
  #allocation4 [shape = 'f32[16,1]{1,0:T(8,128)}', space=vmem, size = 0x2000, scoped, tag = 'scratch operand']
  #allocation5 [shape = 'f32[16,1]{1,0:T(8,128)}', space=vmem, size = 0x2000, scoped, tag = 'scratch operand']
  #allocation6 [shape = 'f32[16,1]{1,0:T(8,128)}', space=vmem, size = 0x2000, scoped, tag = 'scratch operand']
  #allocation7 [shape = 'f32[16,1]{1,0:T(8,128)}', space=vmem, size = 0x2000, scoped, tag = 'scratch operand']
  %s0 = inlined_call_operand.vmem [shape: bf16[32,64], index: 0, kind: input, shape index: {}]
  %s1 = inlined_call_operand.hbm [shape: bf16[64,512], index: 1, kind: input, shape index: {}]
  %s2 = inlined_call_operand.vmem [shape: s32[32,1], index: 2, kind: input, shape index: {}]
  %s3 = inlined_call_operand.vmem [shape: f32[32,1], index: 3, kind: input, shape index: {}]
  %s4 = inlined_call_operand.hbm [shape: f32[32,512], index: 4, kind: output, shape index: {0}]
  %s5 = inlined_call_operand.vmem [shape: f32[32,1], index: 5, kind: output, shape index: {1}]
  %6 = xla_tuple %s4, %s5
  %s7 = sld [smem:[#allocation0]]
  $region73: #{tpu_custom_call.1} parent=0
    _
  %s9 = ssub.s32 1, %s7
  %s10 = scalar_select 0, %s9, %s7
  $region1: #{tpu_custom_call.1} parent=0
    #allocation8 [shape = 'u8[32768]{0}', space=vmem, size = 0x8000, scoped, tag = 'input window, operand 1']
    #allocation9 [shape = 's32[2]{0}', space=sflag, size = 0x8, scoped, tag = 'scoped memory for tpu_custom_call.1']
    #allocation10 [shape = 's32[2]{0}', space=sflag, size = 0x8, scoped, tag = 'scoped memory for tpu_custom_call.1']
    #allocation11 [shape = 'u8[16384]{0}', space=vmem, size = 0x4000, scoped, tag = 'output window, operand 0']
    %11 = vsyncpa [#allocation9], 0
    %s12 = scalar_lea.sflag [#allocation9], 1
    %13 = vsyncpa %s12, 0
    %14 = vsyncpa [#allocation10], 0
    %s15 = scalar_lea.sflag [#allocation10], 1
    %16 = vsyncpa %s15, 0
    loop: start=0, step=1, limit=10
    $region2: #{tpu_custom_call.1} parent=1 // loop_pre_header
      _
    $region3: #{tpu_custom_call.1} parent=1 // loop_header
      %s18 = sphi 0, %s22
      %p19 = scmp.ge.s32.totalorder %s18, 10
      %s25 = sphi 0, %s37
      %s26 = sphi 0, %s33
      %s27 = sphi 0, %s25
      %s28 = sphi 0, %s26
      %s29 = sphi 0, %s27
      %s30 = sphi 0, %s28
      %s40 = sphi 0, %s42
      %s43 = sphi 0, %s40
      %s44 = sphi 0, %s43
      %s60 = sphi 0, %s44
      %s66 = sphi 0, %s68
      %s69 = sphi 0, %s66
      %s70 = sphi 0, %s69
      %s86 = sphi 0, %s70
      %s92 = sphi 0, %s94
      %s95 = sphi 0, %s92
      %s96 = sphi 0, %s95
      %s112 = sphi 0, %s96
      %s118 = sphi 0, %s120
      %s121 = sphi 0, %s118
      %s122 = sphi 0, %s121
      %s138 = sphi 0, %s122
      %s146 = sphi 0, %s148
      %s149 = sphi 0, %s146
      %s150 = sphi 0, %s149
      %s166 = sphi 0, %s150
      %s172 = sphi 0, %s174
      %s175 = sphi 0, %s172
      %s176 = sphi 0, %s175
      %s192 = sphi 0, %s176
    $region4: #{tpu_custom_call.1} parent=1 // loop_header_branch
      %21 = sbr.rel (%p19) target = $region8
    $region5: #{tpu_custom_call.1} parent=1 // loop_body
      %s23 = ssub.s32 %s18, 1
      %s24 = ssub.s32 %s18, 2
      %s31 = sadd.s32 1, %s26
      %p32 = scmp.ge.s32.totalorder %s31, 4
      %s33 = scalar_select %p32, 0, %s31
      %s34 = sadd.s32 1, %s25
      %s35 = scalar_select %p32, %s34, %s25
      %p36 = scmp.ge.s32.totalorder %s35, 2
      %s37 = scalar_select %p36, 0, %s35
      %s38 = ssub.s32 %s25, %s37
      %p39 = scmp.eq.s32.totalorder %s38, 0
      %s41 = sadd.s32 %s40, 1
      %s42 = scalar_select %p39, %s40, %s41
      %p45 = pneg %p39
      %p46 = scmp.eq.s32.totalorder %s18, 7
      %p47 = por %p45, %p46
      %p48 = scmp.ne.s32.totalorder %s40, %s43
      %p49 = scmp.eq.s32.totalorder %s18, 0
      %p50 = por %p48, %p49
      %p51 = scmp.ne.s32.totalorder %s40, %s43
      %p52 = scmp.eq.s32.totalorder %s23, 7
      %p53 = por %p51, %p52
      %p54 = scmp.ne.s32.totalorder %s43, %s44
      %p55 = scmp.eq.s32.totalorder %s23, 0
      %p56 = por %p54, %p55
      %p57 = scmp.ne.s32.totalorder %s43, %s44
      %p58 = scmp.eq.s32.totalorder %s24, 7
      %p59 = por %p57, %p58
      %p61 = scmp.ne.s32.totalorder %s44, %s60
      %p62 = scmp.eq.s32.totalorder %s24, 0
      %p63 = por %p61, %p62
      %s64 = ssub.s32 %s26, %s33
      %p65 = scmp.eq.s32.totalorder %s64, 0
      %s67 = sadd.s32 %s66, 1
      %s68 = scalar_select %p65, %s66, %s67
      %p71 = pneg %p65
      %p72 = scmp.eq.s32.totalorder %s18, 7
      %p73 = por %p71, %p72
      %p74 = scmp.ne.s32.totalorder %s66, %s69
      %p75 = scmp.eq.s32.totalorder %s18, 0
      %p76 = por %p74, %p75
      %p77 = scmp.ne.s32.totalorder %s66, %s69
      %p78 = scmp.eq.s32.totalorder %s23, 7
      %p79 = por %p77, %p78
      %p80 = scmp.ne.s32.totalorder %s69, %s70
      %p81 = scmp.eq.s32.totalorder %s23, 0
      %p82 = por %p80, %p81
      %p83 = scmp.ne.s32.totalorder %s69, %s70
      %p84 = scmp.eq.s32.totalorder %s24, 7
      %p85 = por %p83, %p84
      %p87 = scmp.ne.s32.totalorder %s70, %s86
      %p88 = scmp.eq.s32.totalorder %s24, 0
      %p89 = por %p87, %p88
      %s90 = ssub.s32 %s25, %s37
      %p91 = scmp.eq.s32.totalorder %s90, 0
      %s93 = sadd.s32 %s92, 1
      %s94 = scalar_select %p91, %s92, %s93
      %p97 = pneg %p91
      %p98 = scmp.eq.s32.totalorder %s18, 7
      %p99 = por %p97, %p98
      %p100 = scmp.ne.s32.totalorder %s92, %s95
      %p101 = scmp.eq.s32.totalorder %s18, 0
      %p102 = por %p100, %p101
      %p103 = scmp.ne.s32.totalorder %s92, %s95
      %p104 = scmp.eq.s32.totalorder %s23, 7
      %p105 = por %p103, %p104
      %p106 = scmp.ne.s32.totalorder %s95, %s96
      %p107 = scmp.eq.s32.totalorder %s23, 0
      %p108 = por %p106, %p107
      %p109 = scmp.ne.s32.totalorder %s95, %s96
      %p110 = scmp.eq.s32.totalorder %s24, 7
      %p111 = por %p109, %p110
      %p113 = scmp.ne.s32.totalorder %s96, %s112
      %p114 = scmp.eq.s32.totalorder %s24, 0
      %p115 = por %p113, %p114
      %s116 = ssub.s32 %s25, %s37
      %p117 = scmp.eq.s32.totalorder %s116, 0
      %s119 = sadd.s32 %s118, 1
      %s120 = scalar_select %p117, %s118, %s119
      %p123 = pneg %p117
      %p124 = scmp.eq.s32.totalorder %s18, 7
      %p125 = por %p123, %p124
      %p126 = scmp.ne.s32.totalorder %s118, %s121
      %p127 = scmp.eq.s32.totalorder %s18, 0
      %p128 = por %p126, %p127
      %p129 = scmp.ne.s32.totalorder %s118, %s121
      %p130 = scmp.eq.s32.totalorder %s23, 7
      %p131 = por %p129, %p130
      %p132 = scmp.ne.s32.totalorder %s121, %s122
      %p133 = scmp.eq.s32.totalorder %s23, 0
      %p134 = por %p132, %p133
      %p135 = scmp.ne.s32.totalorder %s121, %s122
      %p136 = scmp.eq.s32.totalorder %s24, 7
      %p137 = por %p135, %p136
      %p139 = scmp.ne.s32.totalorder %s122, %s138
      %p140 = scmp.eq.s32.totalorder %s24, 0
      %p141 = por %p139, %p140
      %s142 = ssub.s32 %s25, %s37
      %s143 = ssub.s32 %s26, %s33
      %s144 = sor.u32 %s142, %s143
      %p145 = scmp.eq.s32.totalorder %s144, 0
      %s147 = sadd.s32 %s146, 1
      %s148 = scalar_select %p145, %s146, %s147
      %p151 = pneg %p145
      %p152 = scmp.eq.s32.totalorder %s18, 7
      %p153 = por %p151, %p152
      %p154 = scmp.ne.s32.totalorder %s146, %s149
      %p155 = scmp.eq.s32.totalorder %s18, 0
      %p156 = por %p154, %p155
      %p157 = scmp.ne.s32.totalorder %s146, %s149
      %p158 = scmp.eq.s32.totalorder %s23, 7
      %p159 = por %p157, %p158
      %p160 = scmp.ne.s32.totalorder %s149, %s150
      %p161 = scmp.eq.s32.totalorder %s23, 0
      %p162 = por %p160, %p161
      %p163 = scmp.ne.s32.totalorder %s149, %s150
      %p164 = scmp.eq.s32.totalorder %s24, 7
      %p165 = por %p163, %p164
      %p167 = scmp.ne.s32.totalorder %s150, %s166
      %p168 = scmp.eq.s32.totalorder %s24, 0
      %p169 = por %p167, %p168
      %s170 = ssub.s32 %s25, %s37
      %p171 = scmp.eq.s32.totalorder %s170, 0
      %s173 = sadd.s32 %s172, 1
      %s174 = scalar_select %p171, %s172, %s173
      %p177 = pneg %p171
      %p178 = scmp.eq.s32.totalorder %s18, 7
      %p179 = por %p177, %p178
      %p180 = scmp.ne.s32.totalorder %s172, %s175
      %p181 = scmp.eq.s32.totalorder %s18, 0
      %p182 = por %p180, %p181
      %p183 = scmp.ne.s32.totalorder %s172, %s175
      %p184 = scmp.eq.s32.totalorder %s23, 7
      %p185 = por %p183, %p184
      %p186 = scmp.ne.s32.totalorder %s175, %s176
      %p187 = scmp.eq.s32.totalorder %s23, 0
      %p188 = por %p186, %p187
      %p189 = scmp.ne.s32.totalorder %s175, %s176
      %p190 = scmp.eq.s32.totalorder %s24, 7
      %p191 = por %p189, %p190
      %p193 = scmp.ne.s32.totalorder %s176, %s192
      %p194 = scmp.eq.s32.totalorder %s24, 0
      %p195 = por %p193, %p194
      %p196 = scmp.le.s32.totalorder 1, %s18
      %p197 = scmp.lt.s32.totalorder %s18, 9
      %p198 = pnand %p196, %p197
      %p199 = pneg %p198
      // Predicated region
      $region9: #{tpu_custom_call.1} parent=5 // pred_check
        _
      $region10: #{tpu_custom_call.1} parent=5 // pred_check_branch
        %201 = sbr.rel (%p198) target = $region12
      $region11: #{tpu_custom_call.1} parent=5 // pred_region
        %s202 = ssub.s32 %s18, 1
      $region12: #{tpu_custom_call.1} parent=5 // pred_fallthru
        _
      %p203 = scmp.lt.s32.totalorder %s18, 8
      // Predicated region
      $region13: #{tpu_custom_call.1} parent=5 // pred_check
        %p204 = pneg %p203
      $region14: #{tpu_custom_call.1} parent=5 // pred_check_branch
        %206 = sbr.rel (%p204) target = $region16
      $region15: #{tpu_custom_call.1} parent=5 // pred_region
        // Predicated region
        $region17: #{tpu_custom_call.1} parent=15 // pred_check
          %p207 = pneg %p50
        $region18: #{tpu_custom_call.1} parent=15 // pred_check_branch
          %209 = sbr.rel (%p207) target = $region20
        $region19: #{tpu_custom_call.1} parent=15 // pred_region
          %s210 = smul.u32 2, %s25
          %p211 = scmp.lt.s32.totalorder %s210, 3
          %s212 = scalar_select %p211, %s210, 3
          %s213 = smul.addr %s212, 4
          %s214 = scalar_lea.vmem %s0, %s213
          %s215 = smul.u32 2, %s25
        $region20: #{tpu_custom_call.1} parent=15 // pred_fallthru
          _
        // Predicated region
        $region21: #{tpu_custom_call.1} parent=15 // pred_check
          %p216 = pneg %p76
        $region22: #{tpu_custom_call.1} parent=15 // pred_check_branch
          %218 = sbr.rel (%p216) target = $region24
        $region23: #{tpu_custom_call.1} parent=15 // pred_region
          %s219 = sand.u32 %s66, 1
          %s220 = scalar_lea.sflag [#allocation9], %s219
          %s221 = sand.u32 %s66, 1
          %s222 = smul.addr %s221, 32
          %s223 = scalar_lea.vmem [#allocation8], %s222
          %s225 = ssub.s32 512, 512
          %226 = vsyncadd %s220, %s225
          %s227 = smul.addr %s26, 64
          %s228 = scalar_lea.hbm %s1, %s227
          %s229 = sshll.u32 %s223, 4
          %s230 = int_to_ptr.vmem [resolvable:$true] %s229
          %235 = dma.hbm_to_vmem [thread:$0]  %s228, 512, %s230, %s220, 256, 64, 4
        $region24: #{tpu_custom_call.1} parent=15 // pred_fallthru
          _
        // Predicated region
        $region25: #{tpu_custom_call.1} parent=15 // pred_check
          %p236 = pneg %p102
        $region26: #{tpu_custom_call.1} parent=15 // pred_check_branch
          %238 = sbr.rel (%p236) target = $region28
        $region27: #{tpu_custom_call.1} parent=15 // pred_region
          %s239 = smul.u32 2, %s25
          %p240 = scmp.lt.s32.totalorder %s239, 3
          %s241 = scalar_select %p240, %s239, 3
          %s242 = smul.addr %s241, 8
          %s243 = scalar_lea.vmem %s2, %s242
          %s244 = smul.u32 2, %s25
        $region28: #{tpu_custom_call.1} parent=15 // pred_fallthru
          _
        // Predicated region
        $region29: #{tpu_custom_call.1} parent=15 // pred_check
          %p245 = pneg %p128
        $region30: #{tpu_custom_call.1} parent=15 // pred_check_branch
          %247 = sbr.rel (%p245) target = $region32
        $region31: #{tpu_custom_call.1} parent=15 // pred_region
          %s248 = smul.u32 2, %s25
          %p249 = scmp.lt.s32.totalorder %s248, 3
          %s250 = scalar_select %p249, %s248, 3
          %s251 = smul.addr %s250, 8
          %s252 = scalar_lea.vmem %s3, %s251
          %s253 = smul.u32 2, %s25
        $region32: #{tpu_custom_call.1} parent=15 // pred_fallthru
          _
      $region16: #{tpu_custom_call.1} parent=5 // pred_fallthru
        _
      %p254 = scmp.le.s32.totalorder 1, %s18
      %p255 = scmp.lt.s32.totalorder %s18, 9
      %p256 = pnand %p254, %p255
      %p257 = pneg %p256
      // Predicated region
      $region33: #{tpu_custom_call.1} parent=5 // pred_check
        _
      $region34: #{tpu_custom_call.1} parent=5 // pred_check_branch
        %259 = sbr.rel (%p256) target = $region36
      $region35: #{tpu_custom_call.1} parent=5 // pred_region
        %s260 = ssub.s32 %s18, 1
        %s261 = sand.u32 %s69, 1
        %s262 = scalar_lea.sflag [#allocation9], %s261
        %s263 = sand.u32 %s69, 1
        %s264 = smul.addr %s263, 32
        %s265 = scalar_lea.vmem [#allocation8], %s264
        // Predicated region
        $region37: #{tpu_custom_call.1} parent=35 // pred_check
          %p266 = pneg %p82
        $region38: #{tpu_custom_call.1} parent=35 // pred_check_branch
          %268 = sbr.rel (%p266) target = $region40
        $region39: #{tpu_custom_call.1} parent=35 // pred_region
          %269 = dma.done %s262, 512
        $region40: #{tpu_custom_call.1} parent=35 // pred_fallthru
          _
        %s270 = smul.u32 2, %s27
        %p271 = scmp.lt.s32.totalorder %s270, 3
        %s272 = scalar_select %p271, %s270, 3
        %s273 = smul.addr %s272, 4
        %s274 = scalar_lea.vmem %s0, %s273
        %p275 = pneg %p56
        %p276 = pneg %p53
        %s277 = sand.u32 %s69, 1
        %s278 = scalar_lea.sflag [#allocation9], %s277
        %s279 = sand.u32 %s69, 1
        %s280 = smul.addr %s279, 32
        %s281 = scalar_lea.vmem [#allocation8], %s280
        %p282 = pneg %p82
        %p283 = pneg %p79
        %s284 = smul.u32 2, %s27
        %p285 = scmp.lt.s32.totalorder %s284, 3
        %s286 = scalar_select %p285, %s284, 3
        %s287 = smul.addr %s286, 8
        %s288 = scalar_lea.vmem %s2, %s287
        %p289 = pneg %p108
        %p290 = pneg %p105
        %s291 = smul.u32 2, %s27
        %p292 = scmp.lt.s32.totalorder %s291, 3
        %s293 = scalar_select %p292, %s291, 3
        %s294 = smul.addr %s293, 8
        %s295 = scalar_lea.vmem %s3, %s294
        %p296 = pneg %p134
        %p297 = pneg %p131
        %p298 = pneg %p162
        %p299 = pneg %p159
        %s300 = sand.u32 %s149, 1
        %s301 = scalar_lea.sflag [#allocation10], %s300
        %s302 = sand.u32 %s149, 1
        %s303 = smul.addr %s302, 16
        %s304 = scalar_lea.vmem [#allocation11], %s303
        %p305 = pneg %p188
        %p306 = pneg %p185
        %s307 = smul.u32 2, %s27
        %p308 = scmp.lt.s32.totalorder %s307, 3
        %s309 = scalar_select %p308, %s307, 3
        %s310 = smul.addr %s309, 8
        %s311 = scalar_lea.vmem %s5, %s310
        %s312 = smul.u32 2, %s27
        %p313 = scmp.lt.s32.totalorder %s312, 3
        %s314 = scalar_select %p313, %s312, 3
        %s315 = smul.addr %s314, 4
        %s316 = scalar_lea.vmem %s0, %s315
        %s317 = smul.u32 2, %s27
        %s318 = smul.u32 2, %s27
        %p319 = scmp.lt.s32.totalorder %s318, 3
        %s320 = scalar_select %p319, %s318, 3
        %s321 = smul.addr %s320, 8
        %s322 = scalar_lea.vmem %s2, %s321
        %s323 = smul.u32 2, %s27
        %s324 = smul.u32 2, %s27
        %p325 = scmp.lt.s32.totalorder %s324, 3
        %s326 = scalar_select %p325, %s324, 3
        %s327 = smul.addr %s326, 8
        %s328 = scalar_lea.vmem %s3, %s327
        %s329 = smul.u32 2, %s27
        %s330 = smul.u32 2, %s27
        %s331 = smul.u32 2, %s27
        %p332 = scmp.lt.s32.totalorder %s331, 3
        %s333 = scalar_select %p332, %s331, 3
        %s334 = smul.addr %s333, 8
        %s335 = scalar_lea.vmem %s5, %s334
        %s336 = smul.u32 2, %s27
        %p338 = scmp.eq.s32.totalorder %s28, 0
        // Predicated region
        $region41: #{tpu_custom_call.1} parent=35 // pred_check
          %p339 = pneg %p338
        $region42: #{tpu_custom_call.1} parent=35 // pred_check_branch
          %341 = sbr.rel (%p339) target = $region44
        $region43: #{tpu_custom_call.1} parent=35 // pred_region
          %v342 = vld [vmem:[%s328] sm:$0xff]
          %v343 = vld [vmem:[%s328 + $0x8] sm:$0xff]
          %v344 = vand.u32 2147483647, %v342
          %vm345 = vcmp.le.f32.partialorder %v344, 0.7853982
          %vm346 = vcmp.lt.s32.totalorder %v342, 0
          %v347 = vand.u32 %v342, 2139095040
          %v348 = vshrl.u32 %v347, 23
          %v349 = vsub.s32 %v348, 127
          %v350 = vand.u32 2147483647, %v342
          %v351 = vand.u32 %v350, 8388607
          %v352 = vor.u32 %v351, 8388608
          %v353 = vsub.s32 0, %v352
          %v354 = vadd.s32 %v349, 1
          %vm355 = vcmp.gt.s32.totalorder %v354, 0
          %v356 = vsel %vm355, %v354, 0
          %v357 = vshrl.u32 %v356, 5
          %v358 = vand.u32 %v356, 31
          %v359 = vsub.s32 32, %v358
          %v360 = vshrl.u32 683565275, %v359
          %v361 = vshll.u32 683565275, %v358
          %v362 = vshrl.u32 2475754826, %v359
          %v363 = vor.u32 %v361, %v362
          %v364 = vshll.u32 2475754826, %v358
          %v365 = vshrl.u32 2131351028, %v359
          %v366 = vor.u32 %v364, %v365
          %v367 = vshll.u32 2131351028, %v358
          %v368 = vshrl.u32 2102212464, %v359
          %v369 = vor.u32 %v367, %v368
          %v370 = vshll.u32 2102212464, %v358
          %v371 = vshrl.u32 920167782, %v359
          %v372 = vor.u32 %v370, %v371
          %v373 = vshll.u32 920167782, %v358
          %v374 = vshrl.u32 1326507024, %v359
          %v375 = vor.u32 %v373, %v374
          %vm376 = vcmp.lt.s32.totalorder %v357, 1
          %vm377 = vcmp.lt.s32.totalorder %v357, 2
          %vm378 = vcmp.lt.s32.totalorder %v357, 3
          %vm379 = vcmp.lt.s32.totalorder %v357, 4
          %v380 = vsel %vm376, %v360, %v363
          %v381 = vsel %vm379, %v369, 2102212464
          %v382 = vsel %vm378, %v366, %v381
          %v383 = vsel %vm377, %v380, %v382
          %v384 = vsel %vm376, %v363, %v366
          %v385 = vsel %vm379, %v372, 920167782
          %v386 = vsel %vm378, %v369, %v385
          %v387 = vsel %vm377, %v384, %v386
          %v388 = vsel %vm376, %v366, %v369
          %v389 = vsel %vm379, %v375, 1326507024
          %v390 = vsel %vm378, %v372, %v389
          %v391 = vsel %vm377, %v388, %v390
          %v392 = vshll.u32 %v352, 8
          %v393 = vmul.u32.u64.compose %v392, %v391
          %v394 = vextract.low.u32 %v393
          %v395 = vextract.high.u32 %v393
          %v396 = vmul.u32.u64.compose %v392, %v387
          %v397 = vextract.low.u32 %v396
          %v398 = vextract.high.u32 %v396
          %v399 = vmul.u32 %v392, %v383
          %v400 = vadd.s32 %v395, %v397
          %vm401 = vc.u32 %v395, %v397
          %v402 = vadd.s32 %v398, 1
          %v403 = vsel %vm401, %v402, %v398
          %v404 = vadd.s32 %v399, %v403
          %v405 = vadd.s32 %v404, 536870912
          %v406 = vshrl.u32 %v405, 30
          %v407 = vshll.u32 %v406, 30
          %v408 = vsub.s32 %v404, %v407
          %vm409 = vcmp.lt.s32.totalorder %v408, 0
          %v410 = vsub.s32 0, %v408
          %v411 = vsel %vm409, %v410, %v408
          %v412 = vclz %v411
          %v413 = vsub.s32 %v412, 2
          %vm414 = vcmp.gt.s32.totalorder 0, %v413
          %v415 = vsel %vm414, 0, %v413
          %v416 = vsub.s32 32, %v415
          %v417 = vshll.u32 %v408, %v415
          %v418 = vshrl.u32 %v400, %v416
          %v419 = vor.u32 %v417, %v418
          %v420 = vsub.s32 4294967266, %v415
          %v421 = vadd.s32 %v420, 127
          %v422 = vshll.u32 %v421, 23
          %v423 = vor.u32 4788187, %v422
          %v424 = vand.u32 2147483647, %v423
          %v426 = vcvt.s32.f32 %v419
          %v427 = vmul.f32 %v426, %v424
          %v428 = vxor.u32 %v427, 2147483648
          %v429 = vsel %vm346, %v428, %v427
          %v430 = vsub.s32 4, %v406
          %v431 = vsel %vm346, %v430, %v406
          %v432 = vsel %vm345, %v342, %v429
          %v433 = vsel %vm345, 0, %v431
          %v434 = vcosq.f32.pop %v432
          %v435 = vsinq.f32.pop %v432
          %vm436 = vweird.f32 %v342
          %v437 = vand.u32 %v433, 3
          %vm438 = vcmp.lt.s32.totalorder %v437, 2
          %vm439 = vcmp.eq.s32.totalorder %v437, 0
          %v440 = vxor.u32 %v435, 2147483648
          %v441 = vsel %vm439, %v434, %v440
          %vm442 = vcmp.eq.s32.totalorder %v437, 2
          %v443 = vxor.u32 %v434, 2147483648
          %v444 = vsel %vm442, %v443, %v435
          %v445 = vsel %vm438, %v441, %v444
          %v446 = vsel %vm436, nan, %v445
          %v447 = vand.u32 2147483647, %v343
          %vm448 = vcmp.le.f32.partialorder %v447, 0.7853982
          %vm449 = vcmp.lt.s32.totalorder %v343, 0
          %v450 = vand.u32 %v343, 2139095040
          %v451 = vshrl.u32 %v450, 23
          %v452 = vsub.s32 %v451, 127
          %v453 = vand.u32 2147483647, %v343
          %v454 = vand.u32 %v453, 8388607
          %v455 = vor.u32 %v454, 8388608
          %v456 = vsub.s32 0, %v455
          %v457 = vadd.s32 %v452, 1
          %vm458 = vcmp.gt.s32.totalorder %v457, 0
          %v459 = vsel %vm458, %v457, 0
          %v460 = vshrl.u32 %v459, 5
          %v461 = vand.u32 %v459, 31
          %v462 = vsub.s32 32, %v461
          %v463 = vshrl.u32 683565275, %v462
          %v464 = vshll.u32 683565275, %v461
          %v465 = vshrl.u32 2475754826, %v462
          %v466 = vor.u32 %v464, %v465
          %v467 = vshll.u32 2475754826, %v461
          %v468 = vshrl.u32 2131351028, %v462
          %v469 = vor.u32 %v467, %v468
          %v470 = vshll.u32 2131351028, %v461
          %v471 = vshrl.u32 2102212464, %v462
          %v472 = vor.u32 %v470, %v471
          %v473 = vshll.u32 2102212464, %v461
          %v474 = vshrl.u32 920167782, %v462
          %v475 = vor.u32 %v473, %v474
          %v476 = vshll.u32 920167782, %v461
          %v477 = vshrl.u32 1326507024, %v462
          %v478 = vor.u32 %v476, %v477
          %vm479 = vcmp.lt.s32.totalorder %v460, 1
          %vm480 = vcmp.lt.s32.totalorder %v460, 2
          %vm481 = vcmp.lt.s32.totalorder %v460, 3
          %vm482 = vcmp.lt.s32.totalorder %v460, 4
          %v483 = vsel %vm479, %v463, %v466
          %v484 = vsel %vm482, %v472, 2102212464
          %v485 = vsel %vm481, %v469, %v484
          %v486 = vsel %vm480, %v483, %v485
          %v487 = vsel %vm479, %v466, %v469
          %v488 = vsel %vm482, %v475, 920167782
          %v489 = vsel %vm481, %v472, %v488
          %v490 = vsel %vm480, %v487, %v489
          %v491 = vsel %vm479, %v469, %v472
          %v492 = vsel %vm482, %v478, 1326507024
          %v493 = vsel %vm481, %v475, %v492
          %v494 = vsel %vm480, %v491, %v493
          %v495 = vshll.u32 %v455, 8
          %v496 = vmul.u32.u64.compose %v495, %v494
          %v497 = vextract.low.u32 %v496
          %v498 = vextract.high.u32 %v496
          %v499 = vmul.u32.u64.compose %v495, %v490
          %v500 = vextract.low.u32 %v499
          %v501 = vextract.high.u32 %v499
          %v502 = vmul.u32 %v495, %v486
          %v503 = vadd.s32 %v498, %v500
          %vm504 = vc.u32 %v498, %v500
          %v505 = vadd.s32 %v501, 1
          %v506 = vsel %vm504, %v505, %v501
          %v507 = vadd.s32 %v502, %v506
          %v508 = vadd.s32 %v507, 536870912
          %v509 = vshrl.u32 %v508, 30
          %v510 = vshll.u32 %v509, 30
          %v511 = vsub.s32 %v507, %v510
          %vm512 = vcmp.lt.s32.totalorder %v511, 0
          %v513 = vsub.s32 0, %v511
          %v514 = vsel %vm512, %v513, %v511
          %v515 = vclz %v514
          %v516 = vsub.s32 %v515, 2
          %vm517 = vcmp.gt.s32.totalorder 0, %v516
          %v518 = vsel %vm517, 0, %v516
          %v519 = vsub.s32 32, %v518
          %v520 = vshll.u32 %v511, %v518
          %v521 = vshrl.u32 %v503, %v519
          %v522 = vor.u32 %v520, %v521
          %v523 = vsub.s32 4294967266, %v518
          %v524 = vadd.s32 %v523, 127
          %v525 = vshll.u32 %v524, 23
          %v526 = vor.u32 4788187, %v525
          %v527 = vand.u32 2147483647, %v526
          %v529 = vcvt.s32.f32 %v522
          %v530 = vmul.f32 %v529, %v527
          %v531 = vxor.u32 %v530, 2147483648
          %v532 = vsel %vm449, %v531, %v530
          %v533 = vsub.s32 4, %v509
          %v534 = vsel %vm449, %v533, %v509
          %v535 = vsel %vm448, %v343, %v532
          %v536 = vsel %vm448, 0, %v534
          %v537 = vcosq.f32.pop %v535
          %v538 = vsinq.f32.pop %v535
          %vm539 = vweird.f32 %v343
          %v540 = vand.u32 %v536, 3
          %vm541 = vcmp.lt.s32.totalorder %v540, 2
          %vm542 = vcmp.eq.s32.totalorder %v540, 0
          %v543 = vxor.u32 %v538, 2147483648
          %v544 = vsel %vm542, %v537, %v543
          %vm545 = vcmp.eq.s32.totalorder %v540, 2
          %v546 = vxor.u32 %v537, 2147483648
          %v547 = vsel %vm545, %v546, %v538
          %v548 = vsel %vm541, %v544, %v547
          %v549 = vsel %vm539, nan, %v548
          %v550 = vand.u32 2147483647, %v342
          %vm551 = vcmp.le.f32.partialorder %v550, 0.7853982
          %vm552 = vcmp.lt.s32.totalorder %v342, 0
          %v553 = vand.u32 %v342, 2139095040
          %v554 = vshrl.u32 %v553, 23
          %v555 = vsub.s32 %v554, 127
          %v556 = vand.u32 2147483647, %v342
          %v557 = vand.u32 %v556, 8388607
          %v558 = vor.u32 %v557, 8388608
          %v559 = vsub.s32 0, %v558
          %v560 = vadd.s32 %v555, 1
          %vm561 = vcmp.gt.s32.totalorder %v560, 0
          %v562 = vsel %vm561, %v560, 0
          %v563 = vshrl.u32 %v562, 5
          %v564 = vand.u32 %v562, 31
          %v565 = vsub.s32 32, %v564
          %v566 = vshrl.u32 683565275, %v565
          %v567 = vshll.u32 683565275, %v564
          %v568 = vshrl.u32 2475754826, %v565
          %v569 = vor.u32 %v567, %v568
          %v570 = vshll.u32 2475754826, %v564
          %v571 = vshrl.u32 2131351028, %v565
          %v572 = vor.u32 %v570, %v571
          %v573 = vshll.u32 2131351028, %v564
          %v574 = vshrl.u32 2102212464, %v565
          %v575 = vor.u32 %v573, %v574
          %v576 = vshll.u32 2102212464, %v564
          %v577 = vshrl.u32 920167782, %v565
          %v578 = vor.u32 %v576, %v577
          %v579 = vshll.u32 920167782, %v564
          %v580 = vshrl.u32 1326507024, %v565
          %v581 = vor.u32 %v579, %v580
          %vm582 = vcmp.lt.s32.totalorder %v563, 1
          %vm583 = vcmp.lt.s32.totalorder %v563, 2
          %vm584 = vcmp.lt.s32.totalorder %v563, 3
          %vm585 = vcmp.lt.s32.totalorder %v563, 4
          %v586 = vsel %vm582, %v566, %v569
          %v587 = vsel %vm585, %v575, 2102212464
          %v588 = vsel %vm584, %v572, %v587
          %v589 = vsel %vm583, %v586, %v588
          %v590 = vsel %vm582, %v569, %v572
          %v591 = vsel %vm585, %v578, 920167782
          %v592 = vsel %vm584, %v575, %v591
          %v593 = vsel %vm583, %v590, %v592
          %v594 = vsel %vm582, %v572, %v575
          %v595 = vsel %vm585, %v581, 1326507024
          %v596 = vsel %vm584, %v578, %v595
          %v597 = vsel %vm583, %v594, %v596
          %v598 = vshll.u32 %v558, 8
          %v599 = vmul.u32.u64.compose %v598, %v597
          %v600 = vextract.low.u32 %v599
          %v601 = vextract.high.u32 %v599
          %v602 = vmul.u32.u64.compose %v598, %v593
          %v603 = vextract.low.u32 %v602
          %v604 = vextract.high.u32 %v602
          %v605 = vmul.u32 %v598, %v589
          %v606 = vadd.s32 %v601, %v603
          %vm607 = vc.u32 %v601, %v603
          %v608 = vadd.s32 %v604, 1
          %v609 = vsel %vm607, %v608, %v604
          %v610 = vadd.s32 %v605, %v609
          %v611 = vadd.s32 %v610, 536870912
          %v612 = vshrl.u32 %v611, 30
          %v613 = vshll.u32 %v612, 30
          %v614 = vsub.s32 %v610, %v613
          %vm615 = vcmp.lt.s32.totalorder %v614, 0
          %v616 = vsub.s32 0, %v614
          %v617 = vsel %vm615, %v616, %v614
          %v618 = vclz %v617
          %v619 = vsub.s32 %v618, 2
          %vm620 = vcmp.gt.s32.totalorder 0, %v619
          %v621 = vsel %vm620, 0, %v619
          %v622 = vsub.s32 32, %v621
          %v623 = vshll.u32 %v614, %v621
          %v624 = vshrl.u32 %v606, %v622
          %v625 = vor.u32 %v623, %v624
          %v626 = vsub.s32 4294967266, %v621
          %v627 = vadd.s32 %v626, 127
          %v628 = vshll.u32 %v627, 23
          %v629 = vor.u32 4788187, %v628
          %v630 = vand.u32 2147483647, %v629
          %v632 = vcvt.s32.f32 %v625
          %v633 = vmul.f32 %v632, %v630
          %v634 = vxor.u32 %v633, 2147483648
          %v635 = vsel %vm552, %v634, %v633
          %v636 = vsub.s32 4, %v612
          %v637 = vsel %vm552, %v636, %v612
          %v638 = vsel %vm551, %v342, %v635
          %v639 = vsel %vm551, 0, %v637
          %v640 = vcosq.f32.pop %v638
          %v641 = vsinq.f32.pop %v638
          %vm642 = vweird.f32 %v342
          %v643 = vadd.s32 %v639, 3
          %v644 = vand.u32 %v643, 3
          %vm645 = vcmp.lt.s32.totalorder %v644, 2
          %vm646 = vcmp.eq.s32.totalorder %v644, 0
          %v647 = vxor.u32 %v641, 2147483648
          %v648 = vsel %vm646, %v640, %v647
          %vm649 = vcmp.eq.s32.totalorder %v644, 2
          %v650 = vxor.u32 %v640, 2147483648
          %v651 = vsel %vm649, %v650, %v641
          %v652 = vsel %vm645, %v648, %v651
          %v653 = vsel %vm642, nan, %v652
          %v654 = vand.u32 2147483647, %v343
          %vm655 = vcmp.le.f32.partialorder %v654, 0.7853982
          %vm656 = vcmp.lt.s32.totalorder %v343, 0
          %v657 = vand.u32 %v343, 2139095040
          %v658 = vshrl.u32 %v657, 23
          %v659 = vsub.s32 %v658, 127
          %v660 = vand.u32 2147483647, %v343
          %v661 = vand.u32 %v660, 8388607
          %v662 = vor.u32 %v661, 8388608
          %v663 = vsub.s32 0, %v662
          %v664 = vadd.s32 %v659, 1
          %vm665 = vcmp.gt.s32.totalorder %v664, 0
          %v666 = vsel %vm665, %v664, 0
          %v667 = vshrl.u32 %v666, 5
          %v668 = vand.u32 %v666, 31
          %v669 = vsub.s32 32, %v668
          %v670 = vshrl.u32 683565275, %v669
          %v671 = vshll.u32 683565275, %v668
          %v672 = vshrl.u32 2475754826, %v669
          %v673 = vor.u32 %v671, %v672
          %v674 = vshll.u32 2475754826, %v668
          %v675 = vshrl.u32 2131351028, %v669
          %v676 = vor.u32 %v674, %v675
          %v677 = vshll.u32 2131351028, %v668
          %v678 = vshrl.u32 2102212464, %v669
          %v679 = vor.u32 %v677, %v678
          %v680 = vshll.u32 2102212464, %v668
          %v681 = vshrl.u32 920167782, %v669
          %v682 = vor.u32 %v680, %v681
          %v683 = vshll.u32 920167782, %v668
          %v684 = vshrl.u32 1326507024, %v669
          %v685 = vor.u32 %v683, %v684
          %vm686 = vcmp.lt.s32.totalorder %v667, 1
          %vm687 = vcmp.lt.s32.totalorder %v667, 2
          %vm688 = vcmp.lt.s32.totalorder %v667, 3
          %vm689 = vcmp.lt.s32.totalorder %v667, 4
          %v690 = vsel %vm686, %v670, %v673
          %v691 = vsel %vm689, %v679, 2102212464
          %v692 = vsel %vm688, %v676, %v691
          %v693 = vsel %vm687, %v690, %v692
          %v694 = vsel %vm686, %v673, %v676
          %v695 = vsel %vm689, %v682, 920167782
          %v696 = vsel %vm688, %v679, %v695
          %v697 = vsel %vm687, %v694, %v696
          %v698 = vsel %vm686, %v676, %v679
          %v699 = vsel %vm689, %v685, 1326507024
          %v700 = vsel %vm688, %v682, %v699
          %v701 = vsel %vm687, %v698, %v700
          %v702 = vshll.u32 %v662, 8
          %v703 = vmul.u32.u64.compose %v702, %v701
          %v704 = vextract.low.u32 %v703
          %v705 = vextract.high.u32 %v703
          %v706 = vmul.u32.u64.compose %v702, %v697
          %v707 = vextract.low.u32 %v706
          %v708 = vextract.high.u32 %v706
          %v709 = vmul.u32 %v702, %v693
          %v710 = vadd.s32 %v705, %v707
          %vm711 = vc.u32 %v705, %v707
          %v712 = vadd.s32 %v708, 1
          %v713 = vsel %vm711, %v712, %v708
          %v714 = vadd.s32 %v709, %v713
          %v715 = vadd.s32 %v714, 536870912
          %v716 = vshrl.u32 %v715, 30
          %v717 = vshll.u32 %v716, 30
          %v718 = vsub.s32 %v714, %v717
          %vm719 = vcmp.lt.s32.totalorder %v718, 0
          %v720 = vsub.s32 0, %v718
          %v721 = vsel %vm719, %v720, %v718
          %v722 = vclz %v721
          %v723 = vsub.s32 %v722, 2
          %vm724 = vcmp.gt.s32.totalorder 0, %v723
          %v725 = vsel %vm724, 0, %v723
          %v726 = vsub.s32 32, %v725
          %v727 = vshll.u32 %v718, %v725
          %v728 = vshrl.u32 %v710, %v726
          %v729 = vor.u32 %v727, %v728
          %v730 = vsub.s32 4294967266, %v725
          %v731 = vadd.s32 %v730, 127
          %v732 = vshll.u32 %v731, 23
          %v733 = vor.u32 4788187, %v732
          %v734 = vand.u32 2147483647, %v733
          %v736 = vcvt.s32.f32 %v729
          %v737 = vmul.f32 %v736, %v734
          %v738 = vxor.u32 %v737, 2147483648
          %v739 = vsel %vm656, %v738, %v737
          %v740 = vsub.s32 4, %v716
          %v741 = vsel %vm656, %v740, %v716
          %v742 = vsel %vm655, %v343, %v739
          %v743 = vsel %vm655, 0, %v741
          %v744 = vcosq.f32.pop %v742
          %v745 = vsinq.f32.pop %v742
          %vm746 = vweird.f32 %v343
          %v747 = vadd.s32 %v743, 3
          %v748 = vand.u32 %v747, 3
          %vm749 = vcmp.lt.s32.totalorder %v748, 2
          %vm750 = vcmp.eq.s32.totalorder %v748, 0
          %v751 = vxor.u32 %v745, 2147483648
          %v752 = vsel %vm750, %v744, %v751
          %vm753 = vcmp.eq.s32.totalorder %v748, 2
          %v754 = vxor.u32 %v744, 2147483648
          %v755 = vsel %vm753, %v754, %v745
          %v756 = vsel %vm749, %v752, %v755
          %v757 = vsel %vm746, nan, %v756
          %vm758 = vcmask 7168
          %759 = vst.msk [vmem:[#allocation2] sm:$0xff] %vm758, %v446
          %760 = vst.msk [vmem:[#allocation2 + $0x8] sm:$0xff] %vm758, %v549
          %761 = vst.msk [vmem:[#allocation3] sm:$0xff] %vm758, %v653
          %762 = vst.msk [vmem:[#allocation3 + $0x8] sm:$0xff] %vm758, %v757
          %v763 = vmul.f32 %v653, %v342
          %v764 = vmul.f32 %v757, %v343
          %765 = vst.msk [vmem:[#allocation4] sm:$0xff] %vm758, %v763
          %766 = vst.msk [vmem:[#allocation4 + $0x8] sm:$0xff] %vm758, %v764
          %767 = vst.msk [vmem:[#allocation5] sm:$0xff] %vm758, -1e+30
          %768 = vst.msk [vmem:[#allocation5 + $0x8] sm:$0xff] %vm758, -1e+30
          %769 = vst.msk [vmem:[#allocation6] sm:$0xff] %vm758, 0.0
          %770 = vst.msk [vmem:[#allocation6 + $0x8] sm:$0xff] %vm758, 0.0
          %771 = vst.msk [vmem:[#allocation7] sm:$0xff] %vm758, 0.0
          %772 = vst.msk [vmem:[#allocation7 + $0x8] sm:$0xff] %vm758, 0.0
        $region44: #{tpu_custom_call.1} parent=35 // pred_fallthru
          _
        %v773 = vld [vmem:[%s316] sm:$0xf]
        %v774 = vld [vmem:[%s316 + $0x4] sm:$0xf]
        %v775 = vld [vmem:[%s265] sm:$0xf]
        %v776 = vld [vmem:[%s265 + $0x4] sm:$0xf]
        %v777 = vld [vmem:[%s265 + $0x8] sm:$0xf]
        %v778 = vld [vmem:[%s265 + $0xc] sm:$0xf]
        %v779 = vld [vmem:[%s265 + $0x10] sm:$0xf]
        %v780 = vld [vmem:[%s265 + $0x14] sm:$0xf]
        %v781 = vld [vmem:[%s265 + $0x18] sm:$0xf]
        %v782 = vld [vmem:[%s265 + $0x1c] sm:$0xf]
        %v785 = vunpack.c.l.b16 %v773
        %v786 = vunpack.c.l.b16 %v774
        %v787 = vpack.c.b16 %v786, %v785
        %v796 = vunpack.c.l.b16 %v775
        %v797 = vunpack.c.l.b16 %v776
        %v798 = vunpack.c.l.b16 %v777
        %v799 = vunpack.c.l.b16 %v778
        %v800 = vunpack.c.l.b16 %v779
        %v801 = vunpack.c.l.b16 %v780
        %v802 = vunpack.c.l.b16 %v781
        %v803 = vunpack.c.l.b16 %v782
        %v804 = vpack.c.b16 %v797, %v796
        %v805 = vpack.c.b16 %v799, %v798
        %v806 = vpack.c.b16 %v801, %v800
        %v807 = vpack.c.b16 %v803, %v802
        %vm812 = vcmask 523264
        %v814 = vsel %vm812, %v787, 0
        %816 = vmatprep.subr.bf16.mxu0 0
        %817 = vmatpush1.bf16.msra.mxu0 %v804
        %818 = vmatprep.subr.bf16.mxu0 0
        %819 = vmatpush1.bf16.msra.mxu0 %v805
        %820 = vmatprep.subr.bf16.mxu0 0
        %821 = vmatpush1.bf16.msra.mxu0 %v806
        %822 = vmatprep.subr.bf16.mxu0 0
        %823 = vmatpush1.bf16.msra.mxu0 %v807
        %824 = vmatprep.subr.bf16.mxu0 0
        %825 = vmatpush1.bf16.msra.mxu0 0
        %826 = vmatprep.subr.bf16.mxu0 0
        %827 = vmatpush1.bf16.msra.mxu0 0
        %828 = vmatprep.subr.bf16.mxu0 0
        %829 = vmatpush1.bf16.msra.mxu0 0
        %830 = vmatprep.subr.bf16.mxu0 0
        %831 = vmatpush1.bf16.msra.mxu0 0
        %832 = vmatprep.subr.bf16.mxu0 0
        %833 = vmatpush1.bf16.msra.mxu0 0
        %834 = vmatprep.subr.bf16.mxu0 0
        %835 = vmatpush1.bf16.msra.mxu0 0
        %836 = vmatprep.subr.bf16.mxu0 0
        %837 = vmatpush1.bf16.msra.mxu0 0
        %838 = vmatprep.subr.bf16.mxu0 0
        %839 = vmatpush1.bf16.msra.mxu0 0
        %840 = vmatprep.subr.bf16.mxu0 0
        %841 = vmatpush1.bf16.msra.mxu0 0
        %842 = vmatprep.subr.bf16.mxu0 0
        %843 = vmatpush1.bf16.msra.mxu0 0
        %844 = vmatprep.subr.bf16.mxu0 0
        %845 = vmatpush1.bf16.msra.mxu0 0
        %846 = vmatprep.subr.bf16.mxu0 0
        %847 = vmatpush1.bf16.msra.mxu0 0
        %848 = vmatprep.mubr.bf16.mxu0 0
        %849 = vmatmul.mubr.bf16.gmra.mrb[0].mxu0 %v814
        %v850 = vpop.f32.mrb[0].mxu0
        %v851 = vadd.f32 0.0, %v850
        %v852 = vpop.f32.mrb[0].mxu0
        %v853 = vpop.f32.mrb[0].mxu0
        %v854 = vadd.f32 0.0, %v853
        %v855 = vpop.f32.mrb[0].mxu0
        %856 = vdwg.mxu0
        %v857 = vld [vmem:[%s322] sm:$0xff]
        %v858 = vld [vmem:[%s322 + $0x8] sm:$0xff]
        %v859 = vlaneseq
        %v860 = vand.u32 %v859, 127
        %s861 = smul.u32 %s28, 128
        %v862 = vstv %s861
        %v863 = vadd.s32 %v860, %v862
        %864 = vset.pattern.permute.xlu0 0
        %865 = vperm.xlu0 %864, %v857
        %v866 = vpop.permute.xlu0 %865
        %867 = vset.pattern.permute.xlu0 0
        %868 = vperm.xlu0 %867, %v858
        %v869 = vpop.permute.xlu0 %868
        %vm870 = vcmp.eq.s32.totalorder %v863, %v866
        %vm871 = vcmp.eq.s32.totalorder %v863, %v869
        %v872 = vsel %vm870, %v851, 0.0
        %v873 = vsel %vm871, %v854, 0.0
        %874 = vadd.xlane.f32.xlu0 %v872
        %v875 = vpop.xlane.xlu0 %874
        %876 = vadd.xlane.f32.xlu0 %v873
        %v877 = vpop.xlane.xlu0 %876
        %v878 = vmul.f32 %v875, %v875
        %v879 = vmul.f32 %v877, %v877
        %v880 = vsub.f32 1.0, %v878
        %v881 = vsub.f32 1.0, %v879
        %v882 = vadd.f32 %v880, 1e-05
        %v883 = vadd.f32 %v881, 1e-05
        %v884 = vrsqrt.pop %v882
        %v885 = vmul.f32 %v882, %v884
        %vm886 = vcmp.eq.f32.partialorder %v882, inf
        %v887 = vsel %vm886, %v882, %v885
        %vm888 = vcmp.eq.f32.partialorder %v882, 0.0
        %v889 = vand.u32 %v882, 2147483648
        %v890 = vsel %vm888, %v889, %v887
        %v891 = vrsqrt.pop %v883
        %v892 = vmul.f32 %v883, %v891
        %vm893 = vcmp.eq.f32.partialorder %v883, inf
        %v894 = vsel %vm893, %v883, %v892
        %vm895 = vcmp.eq.f32.partialorder %v883, 0.0
        %v896 = vand.u32 %v883, 2147483648
        %v897 = vsel %vm895, %v896, %v894
        %v898 = vld [vmem:[#allocation2] sm:$0xff]
        %v899 = vld [vmem:[#allocation2 + $0x8] sm:$0xff]
        %v900 = vld [vmem:[#allocation3] sm:$0xff]
        %v901 = vld [vmem:[#allocation3 + $0x8] sm:$0xff]
        %v902 = vmul.f32 %v875, %v898
        %v903 = vmul.f32 %v877, %v899
        %v904 = vmul.f32 %v890, %v900
        %v905 = vmul.f32 %v897, %v901
        %v906 = vsub.f32 %v902, %v904
        %v907 = vsub.f32 %v903, %v905
        %v908 = vsub.f32 0.0, %v898
        %v909 = vsub.f32 0.0, %v899
        %vm910 = vcmp.gt.f32.partialorder %v875, %v908
        %vm911 = vcmp.gt.f32.partialorder %v877, %v909
        %v912 = vld [vmem:[#allocation4] sm:$0xff]
        %v913 = vld [vmem:[#allocation4 + $0x8] sm:$0xff]
        %v914 = vsub.f32 %v875, %v912
        %v915 = vsub.f32 %v877, %v913
        %v916 = vsel %vm910, %v906, %v914
        %v917 = vsel %vm911, %v907, %v915
        %919 = vset.pattern.permute.xlu0 0
        %920 = vperm.xlu0 %919, %v916
        %v921 = vpop.permute.xlu0 %920
        %924 = vset.pattern.permute.xlu0 0
        %925 = vperm.xlu0 %924, %v917
        %v926 = vpop.permute.xlu0 %925
        %v928 = vsel %vm870, %v921, %v851
        %v929 = vsel %vm871, %v926, %v854
        %v930 = vmul.f32 %v928, 30.0
        %v931 = vmul.f32 %v929, 30.0
        %932 = vst [vmem:[%s304] sm:$0xff] %v930
        %933 = vst [vmem:[%s304 + $0x8] sm:$0xff] %v931
        %vm934 = vcmp.ge.s32.totalorder %v857, %v862
        %vm935 = vcmp.ge.s32.totalorder %v858, %v862
        %s936 = sadd.s32 %s28, 1
        %s937 = smul.u32 %s936, 128
        %v938 = vstv %s937
        %vm939 = vcmp.lt.s32.totalorder %v857, %v938
        %vm940 = vcmp.lt.s32.totalorder %v858, %v938
        %vm941 = vmand %vm934, %vm939
        %vm942 = vmand %vm935, %vm940
        %v943 = vld [vmem:[#allocation7] sm:$0xff]
        %v944 = vld [vmem:[#allocation7 + $0x8] sm:$0xff]
        %v945 = vmul.f32 %v916, 30.0
        %v946 = vmul.f32 %v917, 30.0
        %v947 = vsel %vm941, %v945, 0.0
        %v948 = vsel %vm942, %v946, 0.0
        %v949 = vadd.f32 %v943, %v947
        %v950 = vadd.f32 %v944, %v948
        %vm951 = vcmask 7168
        %952 = vst.msk [vmem:[#allocation7] sm:$0xff] %vm951, %v949
        %953 = vst.msk [vmem:[#allocation7 + $0x8] sm:$0xff] %vm951, %v950
        %p954 = scmp.ne.s32.totalorder %s28, 3
        // Predicated region
        $region45: #{tpu_custom_call.1} parent=35 // pred_check
          %p955 = pneg %p954
        $region46: #{tpu_custom_call.1} parent=35 // pred_check_branch
          %957 = sbr.rel (%p955) target = $region48
        $region47: #{tpu_custom_call.1} parent=35 // pred_region
          %958 = vmax.xlane.f32.xlu0 %v930
          %v959 = vpop.xlane.xlu0 %958
          %960 = vmax.xlane.f32.xlu0 %v931
          %v961 = vpop.xlane.xlu0 %960
          %v962 = vld [vmem:[#allocation5] sm:$0xff]
          %v963 = vld [vmem:[#allocation5 + $0x8] sm:$0xff]
          %v964 = vmax.f32 %v962, %v959
          %v965 = vmax.f32 %v963, %v961
          %v966 = vsub.f32 %v962, %v964
          %v967 = vsub.f32 %v963, %v965
          %v968 = vmul.f32 %v966, 1.442695
          %v969 = vpow.pop %v968
          %v970 = vmul.f32 %v967, 1.442695
          %v971 = vpow.pop %v970
          %v972 = vld [vmem:[#allocation6] sm:$0xff]
          %v973 = vld [vmem:[#allocation6 + $0x8] sm:$0xff]
          %v974 = vmul.f32 %v969, %v972
          %v975 = vmul.f32 %v971, %v973
          %977 = vset.pattern.permute.xlu0 0
          %978 = vperm.xlu0 %977, %v964
          %v979 = vpop.permute.xlu0 %978
          %982 = vset.pattern.permute.xlu0 0
          %983 = vperm.xlu0 %982, %v965
          %v984 = vpop.permute.xlu0 %983
          %v986 = vsub.f32 %v930, %v979
          %v987 = vsub.f32 %v931, %v984
          %v988 = vmul.f32 %v986, 1.442695
          %v989 = vpow.pop %v988
          %v990 = vmul.f32 %v987, 1.442695
          %v991 = vpow.pop %v990
          %992 = vadd.xlane.f32.xlu0 %v989
          %v993 = vpop.xlane.xlu0 %992
          %994 = vadd.xlane.f32.xlu0 %v991
          %v995 = vpop.xlane.xlu0 %994
          %v996 = vadd.f32 %v974, %v993
          %v997 = vadd.f32 %v975, %v995
          %998 = vst.msk [vmem:[#allocation6] sm:$0xff] %vm951, %v996
          %999 = vst.msk [vmem:[#allocation6 + $0x8] sm:$0xff] %vm951, %v997
          %1000 = vst.msk [vmem:[#allocation5] sm:$0xff] %vm951, %v964
          %1001 = vst.msk [vmem:[#allocation5 + $0x8] sm:$0xff] %vm951, %v965
        $region48: #{tpu_custom_call.1} parent=35 // pred_fallthru
          _
        %p1002 = scmp.eq.s32.totalorder %s28, 3
        // Predicated region
        $region49: #{tpu_custom_call.1} parent=35 // pred_check
          %p1003 = pneg %p1002
        $region50: #{tpu_custom_call.1} parent=35 // pred_check_branch
          %1005 = sbr.rel (%p1003) target = $region52
        $region51: #{tpu_custom_call.1} parent=35 // pred_region
          %vm1006 = vcmp.lt.s32.totalorder %v863, 500
          %v1007 = vsel %vm1006, %v930, -1e+30
          %v1008 = vsel %vm1006, %v931, -1e+30
          %1009 = vmax.xlane.f32.xlu0 %v1007
          %v1010 = vpop.xlane.xlu0 %1009
          %1011 = vmax.xlane.f32.xlu0 %v1008
          %v1012 = vpop.xlane.xlu0 %1011
          %v1013 = vld [vmem:[#allocation5] sm:$0xff]
          %v1014 = vld [vmem:[#allocation5 + $0x8] sm:$0xff]
          %v1015 = vmax.f32 %v1013, %v1010
          %v1016 = vmax.f32 %v1014, %v1012
          %v1017 = vsub.f32 %v1013, %v1015
          %v1018 = vsub.f32 %v1014, %v1016
          %v1019 = vmul.f32 %v1017, 1.442695
          %v1020 = vpow.pop %v1019
          %v1021 = vmul.f32 %v1018, 1.442695
          %v1022 = vpow.pop %v1021
          %v1023 = vld [vmem:[#allocation6] sm:$0xff]
          %v1024 = vld [vmem:[#allocation6 + $0x8] sm:$0xff]
          %v1025 = vmul.f32 %v1020, %v1023
          %v1026 = vmul.f32 %v1022, %v1024
          %1028 = vset.pattern.permute.xlu0 0
          %1029 = vperm.xlu0 %1028, %v1015
          %v1030 = vpop.permute.xlu0 %1029
          %1033 = vset.pattern.permute.xlu0 0
          %1034 = vperm.xlu0 %1033, %v1016
          %v1035 = vpop.permute.xlu0 %1034
          %v1037 = vsub.f32 %v1007, %v1030
          %v1038 = vsub.f32 %v1008, %v1035
          %v1039 = vmul.f32 %v1037, 1.442695
          %v1040 = vpow.pop %v1039
          %v1041 = vmul.f32 %v1038, 1.442695
          %v1042 = vpow.pop %v1041
          %1043 = vadd.xlane.f32.xlu0 %v1040
          %v1044 = vpop.xlane.xlu0 %1043
          %1045 = vadd.xlane.f32.xlu0 %v1042
          %v1046 = vpop.xlane.xlu0 %1045
          %v1047 = vadd.f32 %v1025, %v1044
          %v1048 = vadd.f32 %v1026, %v1046
          %1049 = vst.msk [vmem:[#allocation6] sm:$0xff] %vm951, %v1047
          %1050 = vst.msk [vmem:[#allocation6 + $0x8] sm:$0xff] %vm951, %v1048
          %1051 = vst.msk [vmem:[#allocation5] sm:$0xff] %vm951, %v1015
          %1052 = vst.msk [vmem:[#allocation5 + $0x8] sm:$0xff] %vm951, %v1016
          %v1053 = vld [vmem:[#allocation5] sm:$0xff]
          %v1054 = vld [vmem:[#allocation5 + $0x8] sm:$0xff]
          %v1055 = vld [vmem:[#allocation6] sm:$0xff]
          %v1056 = vld [vmem:[#allocation6 + $0x8] sm:$0xff]
          %v1057 = vlog2.pop %v1055
          %v1058 = vmul.f32 %v1057, 0.6931472
          %v1059 = vlog2.pop %v1056
          %v1060 = vmul.f32 %v1059, 0.6931472
          %v1061 = vadd.f32 %v1053, %v1058
          %v1062 = vadd.f32 %v1054, %v1060
          %v1063 = vld [vmem:[#allocation7] sm:$0xff]
          %v1064 = vld [vmem:[#allocation7 + $0x8] sm:$0xff]
          %v1065 = vsub.f32 %v1061, %v1063
          %v1066 = vsub.f32 %v1062, %v1064
          %1067 = vst.msk [vmem:[%s335] sm:$0xff] %vm951, %v1065
          %1068 = vst.msk [vmem:[%s335 + $0x8] sm:$0xff] %vm951, %v1066
        $region52: #{tpu_custom_call.1} parent=35 // pred_fallthru
          _
        %s1069 = sand.u32 %s149, 1
        %s1070 = scalar_lea.sflag [#allocation10], %s1069
        %s1071 = sand.u32 %s149, 1
        %s1072 = smul.addr %s1071, 16
        %s1073 = scalar_lea.vmem [#allocation11], %s1072
        %s1074 = smul.u32 2, %s27
        %p1075 = scmp.lt.s32.totalorder %s1074, 3
        %s1076 = scalar_select %p1075, %s1074, 3
        %s1077 = smul.addr %s1076, 8
        %s1078 = scalar_lea.vmem %s5, %s1077
        // Predicated region
        $region53: #{tpu_custom_call.1} parent=35 // pred_check
          %p1079 = pneg %p159
        $region54: #{tpu_custom_call.1} parent=35 // pred_check_branch
          %1081 = sbr.rel (%p1079) target = $region56
        $region55: #{tpu_custom_call.1} parent=35 // pred_region
          %s1082 = smul.u32 2, %s27
          %s1084 = ssub.s32 256, 256
          %1085 = vsyncadd %s1070, %s1084
          %s1086 = smul.addr %s1082, 4
          %s1087 = sadd.s32 %s28, %s1086
          %s1088 = smul.addr %s1087, 128
          %s1089 = scalar_lea.hbm %s4, %s1088
          %s1090 = sshll.u32 %s1073, 4
          %s1091 = int_to_ptr.vmem [resolvable:$true] %s1090
          %1096 = dma.vmem_to_hbm [thread:$0]  %s1091, 256, %s1089, %s1070, 128, 512, 8
        $region56: #{tpu_custom_call.1} parent=35 // pred_fallthru
          _
        // Predicated region
        $region57: #{tpu_custom_call.1} parent=35 // pred_check
          %p1097 = pneg %p185
        $region58: #{tpu_custom_call.1} parent=35 // pred_check_branch
          %1099 = sbr.rel (%p1097) target = $region60
        $region59: #{tpu_custom_call.1} parent=35 // pred_region
          %s1100 = smul.u32 2, %s27
        $region60: #{tpu_custom_call.1} parent=35 // pred_fallthru
          _
      $region36: #{tpu_custom_call.1} parent=5 // pred_fallthru
        _
      %p1101 = scmp.le.s32.totalorder 2, %s18
      // Predicated region
      $region61: #{tpu_custom_call.1} parent=5 // pred_check
        %p1102 = pneg %p1101
      $region62: #{tpu_custom_call.1} parent=5 // pred_check_branch
        %1104 = sbr.rel (%p1102) target = $region64
      $region63: #{tpu_custom_call.1} parent=5 // pred_region
        %s1105 = ssub.s32 %s18, 2
        // Predicated region
        $region65: #{tpu_custom_call.1} parent=63 // pred_check
          %p1106 = pneg %p165
        $region66: #{tpu_custom_call.1} parent=63 // pred_check_branch
          %1108 = sbr.rel (%p1106) target = $region68
        $region67: #{tpu_custom_call.1} parent=63 // pred_region
          %s1109 = sand.u32 %s150, 1
          %s1110 = scalar_lea.sflag [#allocation10], %s1109
          %s1111 = sand.u32 %s150, 1
          %s1112 = smul.addr %s1111, 16
          %s1113 = scalar_lea.vmem [#allocation11], %s1112
          %1114 = dma.done %s1110, 256
        $region68: #{tpu_custom_call.1} parent=63 // pred_fallthru
          _
        // Predicated region
        $region69: #{tpu_custom_call.1} parent=63 // pred_check
          %p1115 = pneg %p191
        $region70: #{tpu_custom_call.1} parent=63 // pred_check_branch
          %1117 = sbr.rel (%p1115) target = $region72
        $region71: #{tpu_custom_call.1} parent=63 // pred_region
          %s1118 = smul.u32 2, %s29
          %p1119 = scmp.lt.s32.totalorder %s1118, 3
          %s1120 = scalar_select %p1119, %s1118, 3
          %s1121 = smul.addr %s1120, 8
          %s1122 = scalar_lea.vmem %s5, %s1121
        $region72: #{tpu_custom_call.1} parent=63 // pred_fallthru
          _
      $region64: #{tpu_custom_call.1} parent=5 // pred_fallthru
        _
    $region6: #{tpu_custom_call.1} parent=1 // loop_footer
      %s22 = sadd.s32 1, %s18
    $region7: #{tpu_custom_call.1} parent=1 // loop_footer_branch
      %17 = sbr.rel target = $region3
    $region8: #{tpu_custom_call.1} parent=1 // loop_exit
      _
    %1123 = vsyncpa [#allocation9], 1
    %s1124 = scalar_lea.sflag [#allocation9], 1
    %1125 = vsyncpa %s1124, 1
    %1126 = vsyncpa [#allocation10], 1
    %s1127 = scalar_lea.sflag [#allocation10], 1
    %1128 = vsyncpa %s1127, 1

</llo_original>
